<compile_context>
chip_gen: v5e
topology: v5e:2x2
jax: 0.10.0
libtpu: 0.0.40
codegen_flags: <defaults>
</compile_context>

<pallas_src>
import math

import jax
import jax.numpy as jnp
from jax.experimental import pallas as pl
from jax.experimental.pallas import tpu as pltpu

_LANES = 128
# Only split the DMA across a parallel grid (for v7x's 2 TCs) when each chunk
# is at least this big; below that a single DMA is already optimal.
_MIN_BYTES_PER_CHUNK = 2 << 20  # 2 MiB


def _dma_copy_whole_kernel(x_ref, o_ref, sem):
    # One HBM->HBM DMA of the entire array.  No VMEM, no vector work.
    cp = pltpu.make_async_copy(x_ref, o_ref, sem)
    cp.start()
    cp.wait()


def _dma_copy_chunk_kernel(x_ref, o_ref, sem):
    # One HBM->HBM DMA per grid step; the grid axis is "parallel" so chunks
    # are sharded across TensorCores on v7x (serial 2-step loop on v5e/v6e).
    i = pl.program_id(0)
    cp = pltpu.make_async_copy(x_ref.at[i], o_ref.at[i], sem)
    cp.start()
    cp.wait()


def _materialized_copy(x2, n_chunks=None):
    """HBM->HBM DMA copy of a (B, N) array via Pallas; returns a new buffer."""
    B, N = x2.shape
    total = B * N
    itemsize = jnp.dtype(x2.dtype).itemsize
    cost = pl.CostEstimate(
        flops=0, transcendentals=0, bytes_accessed=2 * total * itemsize
    )

    # Auto-select chunking: only for large, lane-aligned copies that split
    # evenly (so the (n_chunks, rows, 128) view stays a metadata-only reshape).
    if n_chunks is None:
        big = total * itemsize >= 2 * _MIN_BYTES_PER_CHUNK
        n_chunks = 2 if (big and total % (2 * _LANES) == 0) else 1

    if n_chunks > 1 and total % (n_chunks * _LANES) == 0:
        rows = total // _LANES
        chunk_rows = rows // n_chunks
        x3 = x2.reshape(n_chunks, chunk_rows, _LANES)  # metadata-only
        out = pl.pallas_call(
            _dma_copy_chunk_kernel,
            out_shape=jax.ShapeDtypeStruct(
                (n_chunks, chunk_rows, _LANES), x2.dtype
            ),
            grid=(n_chunks,),
            in_specs=[pl.BlockSpec(memory_space=pl.ANY)],
            out_specs=pl.BlockSpec(memory_space=pl.ANY),
            scratch_shapes=[pltpu.SemaphoreType.DMA],
            compiler_params=pltpu.CompilerParams(
                dimension_semantics=("parallel",)
            ),
            cost_estimate=cost,
        )(x3)
        return out.reshape(B, N)  # metadata-only

    # Shape-agnostic single-DMA path (any dtype, any alignment, any size --
    # there is no VMEM block, so nothing can exceed the scoped-VMEM default).
    return pl.pallas_call(
        _dma_copy_whole_kernel,
        out_shape=jax.ShapeDtypeStruct((B, N), x2.dtype),
        in_specs=[pl.BlockSpec(memory_space=pl.ANY)],
        out_specs=pl.BlockSpec(memory_space=pl.ANY),
        scratch_shapes=[pltpu.SemaphoreType.DMA],
        cost_estimate=cost,
    )(x2)


def flatten(x, materialize=False, n_chunks=None):
    """Equivalent of torch `x.view(x.size(0), -1)`.

    Default (materialize=False): metadata-only `jnp.reshape` -- the optimal
    implementation of Flatten (zero HBM traffic, no kernel launched).

    materialize=True: produce a fresh buffer via a Pallas HBM->HBM DMA copy
    (kernelized variant kept as a fusion / benchmark target).
    """
    B = x.shape[0]
    N = math.prod(x.shape[1:]) if x.ndim > 1 else 1
    y = jnp.reshape(x, (B, N))  # metadata-only for contiguous row-major input
    if not materialize:
        return y
    # Note: input_output_aliases is intentionally not used here -- aliasing a
    # pure copy onto its own input is degenerate; callers wanting donation
    # should use the default zero-cost path, which allocates nothing.
    return _materialized_copy(y, n_chunks=n_chunks)


if __name__ == "__main__":
    # Flatten has no parameters; build a deterministic NCHW input.
    key = jax.random.PRNGKey(0)
    x = jax.random.normal(key, (2, 4, 16, 16), dtype=jnp.float32)
    ref = x.reshape(x.shape[0], -1)  # PyTorch x.view(B, -1) on contiguous NCHW

    # 1) Default zero-cost path (recommended).
    y0 = jax.block_until_ready(flatten(x))
    assert y0.shape == ref.shape and y0.dtype == ref.dtype, (y0.shape, y0.dtype)
    assert bool(jnp.array_equal(y0, ref)), "reshape path mismatch"

    # 2) Materialized Pallas copy: single whole-array HBM->HBM DMA.
    y1 = jax.block_until_ready(flatten(x, materialize=True))
    assert y1.shape == ref.shape and y1.dtype == ref.dtype, (y1.shape, y1.dtype)
    assert bool(jnp.array_equal(y1, ref)), "single-DMA path mismatch"

    # 3) Materialized Pallas copy, chunked across a parallel grid (v7x path).
    y2 = jax.block_until_ready(flatten(x, materialize=True, n_chunks=2))
    assert y2.shape == ref.shape and y2.dtype == ref.dtype, (y2.shape, y2.dtype)
    assert bool(jnp.array_equal(y2, ref)), "chunked-DMA path mismatch"

    # 4) Lane-unaligned shape exercises the shape-agnostic single-DMA path.
    x_odd = jax.random.normal(
        jax.random.PRNGKey(1), (2, 3, 5, 7), dtype=jnp.float32
    )
    y3 = jax.block_until_ready(flatten(x_odd, materialize=True))
    assert bool(jnp.array_equal(y3, x_odd.reshape(2, -1))), "odd-shape mismatch"

    print("KERNEL_OK")
</pallas_src>

<mosaic_0001>
module attributes {stable_mosaic.version = 11 : i64} {
  func.func @_dma_copy_whole_kernel(%arg0: memref<2x1024xf32, #tpu.memory_space<any>>, %arg1: memref<2x1024xf32, #tpu.memory_space<any>>, %arg2: memref<!tpu.dma_semaphore, #tpu.memory_space<semaphore_mem>>) attributes {dimension_semantics = [], scalar_prefetch = 0 : i64, scratch_operands = 1 : i64, tpu.core_type = #tpu.core_type<tc>} {
    tpu.enqueue_dma source(%arg0 : memref<2x1024xf32, #tpu.memory_space<any>>) target(%arg1 : memref<2x1024xf32, #tpu.memory_space<any>>) target_semaphore(%arg2 : memref<!tpu.dma_semaphore, #tpu.memory_space<semaphore_mem>>)
    tpu.wait_dma2 semaphore(%arg2 : memref<!tpu.dma_semaphore, #tpu.memory_space<semaphore_mem>>) src(%arg0 : memref<2x1024xf32, #tpu.memory_space<any>>) dst(%arg1 : memref<2x1024xf32, #tpu.memory_space<any>>)
    return
  }
}

</mosaic_0001>

<llo_original>
// kernel: tpu_custom_call.1
$region0: #{tpu_custom_call.1}
  #allocation0 [shape = 'u32[]', space=smem, size = 0x4, offset = 0x4, fixed_abs, tag = 'smem constant byte address 0x4 - core index']
  #allocation1 [shape = 'u32[72,128]{1,0:T(1,128)}', space=vmem, size = 0x9000, scoped, tag = 'internal scratch']
  #allocation2 [shape = 's32[1]{0}', space=sflag, size = 0x4, scoped, tag = 'scratch operand']
  #allocation3 [shape = 's32[]', space=sflag, size = 0x4, offset = 0, fixed_abs, tag = 'sflag constant byte address 0x0 - dummy sync flag']
  #allocation4 [shape = 'u32[0]{0}', space=smem, size = 0, offset = 0, fixed_abs, tag = 'smem constant byte address 0x0 - null']
  %s0 = inlined_call_operand.hbm [shape: f32[2,1024], index: 0, kind: input, shape index: {}]
  %s1 = inlined_call_operand.hbm [shape: f32[2,1024], index: 1, kind: output, shape index: {}]
  %s2 = sld [smem:[#allocation0]]
  $region2: #{tpu_custom_call.1} parent=0
    _
  %s4 = ssub.s32 1, %s2
  %s5 = scalar_select 0, %s4, %s2
  %s7 = sshll.u32 1, 14
  %s8 = sxor.u32 4294967295, %s7
  %s10 = sshll.u32 %s0, 4
  %s11 = int_to_ptr.hbm [resolvable:$true] %s10
  %s12 = sshll.u32 %s1, 4
  %s13 = int_to_ptr.hbm [resolvable:$true] %s12
  %16 = dma.general %s11, 256, %s13, [#allocation2], [#allocation3], [#allocation4], 0, 0
  %s17 = smul.u32 2, 1
  %s18 = smul.u32 %s17, 8
  %s19 = sshll.u32 %s18, 4
  %20 = dma.done [#allocation2], %s19
  %21 = vsyncmov [#allocation2]
  %s22 = vpop.sfrf %21
  %p23 = scmp.eq.s32.totalorder %s22, 0
  %p24 = pneg %p23
  %26 = shalt.err (%p24)

</llo_original>
